<compile_context>
chip_gen: v6e
topology: v6e:2x2x1
jax: 0.10.0
libtpu: 0.0.40
codegen_flags: <defaults>
</compile_context>

<pallas_src>
import jax
import jax.numpy as jnp
from jax.experimental import pallas as pl
from jax.experimental.pallas import tpu as pltpu


# --------------------------------------------------------------------------- #
# Small helpers
# --------------------------------------------------------------------------- #
def _round_up(x: int, m: int) -> int:
    return ((x + m - 1) // m) * m


def _cdiv(a: int, b: int) -> int:
    return -(-a // b)


def _vmem_capacity_bytes() -> int:
    """Physical VMEM per TensorCore; conservative fallback if query fails."""
    try:
        cap = getattr(pltpu.get_tpu_info(), "vmem_capacity_bytes", None)
        if cap:
            return int(cap)
    except Exception:
        pass
    return 64 * 1024 * 1024  # v7x per-TC physical VMEM (safe lower bound)


def _num_tensorcores() -> int:
    """Heuristic: v7x exposes 2 TensorCores per chip; v5e/v6e have 1."""
    try:
        kind = jax.devices()[0].device_kind.lower()
        if "v7" in kind:
            return 2
    except Exception:
        pass
    return 1


# --------------------------------------------------------------------------- #
# Kernel bodies
# --------------------------------------------------------------------------- #
def _mlp_trunk(x_ref, w1_ref, b1_ref, w2_ref, b2_ref):
    """Two Linear+ReLU layers.  MXU in bf16 with f32 accumulation; VPU epilogues."""
    # Layer 1: cast x to the MXU dtype in-kernel (hides under the matmul).
    h1 = jnp.dot(x_ref[...].astype(w1_ref.dtype), w1_ref[...],
                 preferred_element_type=jnp.float32)
    # Fused bias + ReLU + bf16 cast epilogue (halves the live h1 footprint).
    h1 = jnp.maximum(h1 + b1_ref[...], 0.0).astype(w2_ref.dtype)
    # Layer 2.
    h2 = jnp.dot(h1, w2_ref[...], preferred_element_type=jnp.float32)
    return jnp.maximum(h2 + b2_ref[...], 0.0)


def _hc_critic_kernel_lane_dense(x_ref, w1_ref, b1_ref, w2_ref, b2_ref,
                                 w3_ref, b3_ref, o_ref):
    """Fast path: lane-dense (1, 1, tb) output row (unmasked contiguous stores)."""
    h2 = _mlp_trunk(x_ref, w1_ref, b1_ref, w2_ref, b2_ref)
    # fc_dim -> 1 head: VPU multiply with the lane-dense (1, F) w3 row and a
    # lane (XLU) reduction -- an N=1 MXU matmul would waste the whole array.
    val = jnp.sum(h2 * w3_ref[...], axis=-1, keepdims=True) + b3_ref[0, 0]
    o_ref[...] = val.reshape(o_ref.shape).astype(o_ref.dtype)


def _hc_critic_kernel_column(x_ref, w1_ref, b1_ref, w2_ref, b2_ref,
                             w3_ref, b3_ref, o_ref):
    """Conservative fallback: (tb, 1) column output."""
    h2 = _mlp_trunk(x_ref, w1_ref, b1_ref, w2_ref, b2_ref)
    val = jnp.sum(h2 * w3_ref[...], axis=-1, keepdims=True) + b3_ref[0, 0]
    o_ref[...] = val.astype(o_ref.dtype)


# --------------------------------------------------------------------------- #
# Parameter preparation (hoisted out of the per-call path)
# --------------------------------------------------------------------------- #
def prepare_hc_critic_params(params, mxu_dtype=jnp.bfloat16):
    """Pad feature dims to 128 lanes and cast the big weights to the MXU dtype.

    Call once per parameter update; the per-call forward then only reads the
    already-prepared (bf16, lane-padded) weights -- no per-call pad/cast pass.
    Feature-dim zero padding is exact: padded columns stay zero through every
    layer and the zeroed w3 entries contribute nothing to the head.
    """
    D, F = params["w1"].shape
    F_pad = _round_up(F, 128)
    f32 = jnp.float32
    w1 = jnp.zeros((D, F_pad), mxu_dtype).at[:, :F].set(
        params["w1"].astype(mxu_dtype))
    w2 = jnp.zeros((F_pad, F_pad), mxu_dtype).at[:F, :F].set(
        params["w2"].astype(mxu_dtype))
    b1 = jnp.zeros((1, F_pad), f32).at[:, :F].set(
        params["b1"].reshape(1, F).astype(f32))
    b2 = jnp.zeros((1, F_pad), f32).at[:, :F].set(
        params["b2"].reshape(1, F).astype(f32))
    # w3 as a lane-dense (1, F_pad) f32 row: the head runs on the VPU/XLU.
    w3 = jnp.zeros((1, F_pad), f32).at[:, :F].set(
        params["w3"].reshape(1, F).astype(f32))
    b3 = params["b3"].reshape(1, 1).astype(f32)
    return {"w1": w1, "b1": b1, "w2": w2, "b2": b2, "w3": w3, "b3": b3}


# --------------------------------------------------------------------------- #
# Tile selection
# --------------------------------------------------------------------------- #
def _select_batch_tile(B, D, F_pad, mxu_bytes, vmem_cap, num_tc, batch_tile):
    if batch_tile is None:
        # v5e/v6e (128 MiB VMEM): larger tiles amortize the ~0.35 us/step
        # overhead further; v7x (64 MiB): keep the tile moderate.
        batch_tile = 1024 if vmem_cap >= 100 * 1024 * 1024 else 512
    # VMEM bytes that scale with the tile: x double-buffered (f32),
    # bf16 h1 + f32 h2 intermediates, tiny out blocks.
    per_row = 2 * D * 4 + F_pad * (4 + mxu_bytes) + 2 * 4
    # Resident weights/biases (assume 2x for safety even if single-buffered).
    weights = 2 * ((D + F_pad) * F_pad * mxu_bytes + 3 * 8 * F_pad * 4)
    budget = max(vmem_cap // 2 - weights, 2 * 128 * per_row)
    tb_cap = max(128, (budget // per_row) // 128 * 128)
    tb = min(_round_up(batch_tile, 128), tb_cap)

    if B <= tb and not (num_tc >= 2 and B > 256):
        return B  # one grid step covering the whole (unpadded) batch
    if num_tc >= 2:
        # 2-TensorCore part: force an even number of >= 2 grid steps so the
        # "parallel" axis gives both cores equal work.
        steps = max(2, _cdiv(B, tb))
        steps += steps % 2
        tb = min(tb, _round_up(_cdiv(B, steps), 128))
    return tb


# --------------------------------------------------------------------------- #
# Forward
# --------------------------------------------------------------------------- #
def hc_critic_forward(x, prepared, *, batch_tile=None):
    """Pallas implementation of HC_Critic.forward.

    Args:
      x: (B, input_dim) float32 observations.
      prepared: output of prepare_hc_critic_params (pre-padded bf16 weights).
      batch_tile: optional override for the batch tile.
    Returns:
      (value, {}) with value of shape (B, 1), matching the PyTorch module.
    """
    B, D = x.shape
    assert prepared["w1"].shape[0] == D, "input_dim mismatch with prepared params"
    F_pad = prepared["w1"].shape[1]
    mxu_bytes = jnp.dtype(prepared["w1"].dtype).itemsize

    vmem_cap = _vmem_capacity_bytes()
    num_tc = _num_tensorcores()
    tb = _select_batch_tile(B, D, F_pad, mxu_bytes, vmem_cap, num_tc, batch_tile)
    B_pad = _round_up(B, tb)
    steps = B_pad // tb

    # Pad only the batch rows, only when needed, in f32 (no bf16 host copy of
    # x; the cast happens inside the kernel).  Padded rows produce garbage
    # values that are sliced off below.
    x_p = x if B_pad == B else jnp.pad(x, ((0, B_pad - B), (0, 0)))

    # ---- VMEM budget (generation-aware) -------------------------------------
    est = ((D + F_pad) * F_pad * mxu_bytes        # resident w1 + w2 (bf16)
           + 3 * 8 * F_pad * 4                    # b1, b2, w3 rows (sublane-padded)
           + 2 * tb * D * 4                       # x double buffer (f32)
           + 2 * tb * 128 * 4                     # out blocks (lane-padded f32)
           + tb * F_pad * (4 + mxu_bytes))        # h1 (bf16) + h2 (f32)
    vmem_ceiling = max(vmem_cap - 12 * 1024 * 1024, 32 * 1024 * 1024)
    vmem_limit = int(min(max(32 * 1024 * 1024, 2 * est), vmem_ceiling))

    # ---- Cost estimate for XLA's scheduler ----------------------------------
    flops = 2 * B_pad * (D * F_pad + F_pad * F_pad + F_pad)
    bytes_accessed = (B_pad * D * 4
                      + (D + F_pad) * F_pad * mxu_bytes
                      + 3 * F_pad * 4
                      + B_pad * 4)
    cost = pl.CostEstimate(flops=flops, transcendentals=0,
                           bytes_accessed=bytes_accessed)

    def build(single_buffer_weights, lane_dense_out):
        def wspec(shape):
            # Constant index_map -> never re-DMAed; single-buffer to halve
            # resident weight VMEM on the fast path.
            if single_buffer_weights:
                return pl.BlockSpec(shape, lambda i: (0,) * len(shape),
                                    pipeline_mode=pl.Buffered(1))
            return pl.BlockSpec(shape, lambda i: (0,) * len(shape))

        in_specs = [
            pl.BlockSpec((tb, D), lambda i: (i, 0)),      # x tile (f32, cast in-kernel)
            wspec((D, F_pad)),                            # w1 (bf16, resident)
            wspec((1, F_pad)),                            # b1 (f32)
            wspec((F_pad, F_pad)),                        # w2 (bf16, resident)
            wspec((1, F_pad)),                            # b2 (f32)
            wspec((1, F_pad)),                            # w3 row (f32)
            pl.BlockSpec(memory_space=pltpu.MemorySpace.SMEM),  # b3 scalar
        ]
        if lane_dense_out:
            out_shape = jax.ShapeDtypeStruct((steps, 1, tb), jnp.float32)
            out_specs = pl.BlockSpec((1, 1, tb), lambda i: (i, 0, 0))
            kernel = _hc_critic_kernel_lane_dense
        else:
            out_shape = jax.ShapeDtypeStruct((B_pad, 1), jnp.float32)
            out_specs = pl.BlockSpec((tb, 1), lambda i: (i, 0))
            kernel = _hc_critic_kernel_column
        return pl.pallas_call(
            kernel,
            out_shape=out_shape,
            grid_spec=pltpu.PrefetchScalarGridSpec(
                num_scalar_prefetch=0,
                grid=(steps,),
                in_specs=in_specs,
                out_specs=out_specs,
            ),
            compiler_params=pltpu.CompilerParams(
                dimension_semantics=("parallel",),
                vmem_limit_bytes=vmem_limit,
            ),
            cost_estimate=cost,
        )

    args = (x_p, prepared["w1"], prepared["b1"], prepared["w2"],
            prepared["b2"], prepared["w3"], prepared["b3"])

    try:
        out = build(single_buffer_weights=True, lane_dense_out=True)(*args)
        value = out.reshape(-1)[:B].reshape(B, 1)
    except Exception:
        # Conservative fallback if Buffered(1) / the column->row relayout is
        # unsupported by the installed jax/Mosaic: double-buffered weights and
        # a (tb, 1) column output (previously-validated structure).  Still
        # keeps the hoisted weight prep, in-kernel x cast and the vmem cap.
        out = build(single_buffer_weights=False, lane_dense_out=False)(*args)
        value = out[:B]

    return value, {}


# --------------------------------------------------------------------------- #
# Init + pure-JAX reference
# --------------------------------------------------------------------------- #
def init_hc_critic_params(key, input_dim, fc_dim):
    """Deterministic synthetic init (Kaiming-uniform-ish, like nn.Linear)."""
    k1, k2, k3 = jax.random.split(key, 3)

    def linear_init(k, fan_in, fan_out):
        bound = 1.0 / jnp.sqrt(fan_in)
        kw, kb = jax.random.split(k)
        w = jax.random.uniform(kw, (fan_in, fan_out), jnp.float32,
                               minval=-bound, maxval=bound)
        b = jax.random.uniform(kb, (1, fan_out), jnp.float32,
                               minval=-bound, maxval=bound)
        return w, b

    w1, b1 = linear_init(k1, input_dim, fc_dim)
    w2, b2 = linear_init(k2, fc_dim, fc_dim)
    w3, b3 = linear_init(k3, fc_dim, 1)
    return {"w1": w1, "b1": b1, "w2": w2, "b2": b2, "w3": w3, "b3": b3}


def hc_critic_ref(x, p, mxu_dtype=jnp.float32):
    """Pure-JAX reference.  mxu_dtype=bfloat16 mimics the kernel's MXU casts."""
    def mm(a, w):
        return jnp.dot(a.astype(mxu_dtype), w.astype(mxu_dtype),
                       preferred_element_type=jnp.float32)
    h1 = jnp.maximum(mm(x, p["w1"]) + p["b1"], 0.0)
    h2 = jnp.maximum(mm(h1, p["w2"]) + p["b2"], 0.0)
    # The critic head (fc_dim -> 1) stays in f32 in the kernel as well.
    return h2 @ p["w3"] + p["b3"]


if __name__ == "__main__":
    key = jax.random.PRNGKey(0)
    kx, kp = jax.random.split(key)

    batch, input_dim, fc_dim = 8, 32, 64
    x = jax.random.normal(kx, (batch, input_dim), jnp.float32)
    params = init_hc_critic_params(kp, input_dim, fc_dim)

    # Weight pad/cast is hoisted: done once, reused across forward calls.
    prepared = prepare_hc_critic_params(params)

    value, info = hc_critic_forward(x, prepared)
    value = jax.block_until_ready(value)

    assert value.shape == (batch, 1)
    assert isinstance(info, dict) and len(info) == 0

    # Tight check vs. a reference that applies the same bf16 MXU-operand casts.
    ref_bf16 = hc_critic_ref(x, params, mxu_dtype=jnp.bfloat16)
    assert jnp.allclose(value, ref_bf16, atol=1e-2, rtol=1e-2), (
        float(jnp.max(jnp.abs(value - ref_bf16))))
    # Loose sanity check vs. the pure-f32 forward pass (bf16 MXU contract).
    ref_f32 = hc_critic_ref(x, params, mxu_dtype=jnp.float32)
    assert jnp.allclose(value, ref_f32, atol=5e-2, rtol=5e-2), (
        float(jnp.max(jnp.abs(value - ref_f32))))

    print("KERNEL_OK")
</pallas_src>

<mosaic_0001>
module attributes {stable_mosaic.version = 11 : i64} {
  func.func @_hc_critic_kernel_lane_dense(%arg0: i32, %arg1: memref<8x32xf32, #tpu.memory_space<vmem>>, %arg2: memref<32x128xbf16, #tpu.memory_space<vmem>>, %arg3: memref<1x128xf32, #tpu.memory_space<vmem>>, %arg4: memref<128x128xbf16, #tpu.memory_space<vmem>>, %arg5: memref<1x128xf32, #tpu.memory_space<vmem>>, %arg6: memref<1x128xf32, #tpu.memory_space<vmem>>, %arg7: memref<1x1xf32, #tpu.memory_space<smem>>, %arg8: memref<1x1x8xf32, #tpu.memory_space<vmem>>) attributes {dimension_semantics = [#tpu.dimension_semantics<parallel>], iteration_bounds = array<i64: 1>, scalar_prefetch = 0 : i64, scratch_operands = 0 : i64, tpu.core_type = #tpu.core_type<tc>, window_params = [{transform_indices = @transform_0, window_bounds = array<i64: 8, 32>}, {pipeline_mode = #tpu.pipeline_mode<synchronous>, transform_indices = @transform_1, window_bounds = array<i64: 32, 128>}, {pipeline_mode = #tpu.pipeline_mode<synchronous>, transform_indices = @transform_2, window_bounds = array<i64: 1, 128>}, {pipeline_mode = #tpu.pipeline_mode<synchronous>, transform_indices = @transform_3, window_bounds = array<i64: 128, 128>}, {pipeline_mode = #tpu.pipeline_mode<synchronous>, transform_indices = @transform_4, window_bounds = array<i64: 1, 128>}, {pipeline_mode = #tpu.pipeline_mode<synchronous>, transform_indices = @transform_5, window_bounds = array<i64: 1, 128>}, {transform_indices = @transform_6, window_bounds = array<i64: 1, 1>}, {transform_indices = @transform_7, window_bounds = array<i64: 1, 1, 8>}]} {
    %c0 = arith.constant 0 : index
    %c0_0 = arith.constant 0 : index
    %0 = vector.load %arg1[%c0, %c0_0] : memref<8x32xf32, #tpu.memory_space<vmem>>, vector<8x32xf32>
    %1 = arith.truncf %0 : vector<8x32xf32> to vector<8x32xbf16>
    %c0_1 = arith.constant 0 : index
    %c0_2 = arith.constant 0 : index
    %2 = vector.load %arg2[%c0_1, %c0_2] : memref<32x128xbf16, #tpu.memory_space<vmem>>, vector<32x128xbf16>
    %cst = arith.constant dense<0.000000e+00> : vector<8x128xf32>
    %3 = tpu.matmul %1, %2, %cst {dimension_numbers = #tpu.dot_dimension_numbers<[1], [0], [0], [1], [0, 0, 1, 1], [], []>} : vector<8x32xbf16>, vector<32x128xbf16>, vector<8x128xf32> -> vector<8x128xf32>
    %c0_3 = arith.constant 0 : index
    %c0_4 = arith.constant 0 : index
    %4 = vector.load %arg3[%c0_3, %c0_4] : memref<1x128xf32, #tpu.memory_space<vmem>>, vector<1x128xf32>
    %5 = vector.broadcast %4 : vector<1x128xf32> to vector<8x128xf32>
    %6 = arith.addf %3, %5 : vector<8x128xf32>
    %cst_5 = arith.constant 0.000000e+00 : f32
    %7 = vector.broadcast %cst_5 : f32 to vector<8x128xf32>
    %8 = arith.maximumf %6, %7 : vector<8x128xf32>
    %9 = arith.truncf %8 : vector<8x128xf32> to vector<8x128xbf16>
    %c0_6 = arith.constant 0 : index
    %c0_7 = arith.constant 0 : index
    %10 = vector.load %arg4[%c0_6, %c0_7] : memref<128x128xbf16, #tpu.memory_space<vmem>>, vector<128x128xbf16>
    %cst_8 = arith.constant dense<0.000000e+00> : vector<8x128xf32>
    %11 = tpu.matmul %9, %10, %cst_8 {dimension_numbers = #tpu.dot_dimension_numbers<[1], [0], [0], [1], [0, 0, 1, 1], [], []>} : vector<8x128xbf16>, vector<128x128xbf16>, vector<8x128xf32> -> vector<8x128xf32>
    %c0_9 = arith.constant 0 : index
    %c0_10 = arith.constant 0 : index
    %12 = vector.load %arg5[%c0_9, %c0_10] : memref<1x128xf32, #tpu.memory_space<vmem>>, vector<1x128xf32>
    %13 = vector.broadcast %12 : vector<1x128xf32> to vector<8x128xf32>
    %14 = arith.addf %11, %13 : vector<8x128xf32>
    %cst_11 = arith.constant 0.000000e+00 : f32
    %15 = vector.broadcast %cst_11 : f32 to vector<8x128xf32>
    %16 = arith.maximumf %14, %15 : vector<8x128xf32>
    %c0_12 = arith.constant 0 : index
    %c0_13 = arith.constant 0 : index
    %17 = vector.load %arg6[%c0_12, %c0_13] : memref<1x128xf32, #tpu.memory_space<vmem>>, vector<1x128xf32>
    %18 = vector.broadcast %17 : vector<1x128xf32> to vector<8x128xf32>
    %19 = arith.mulf %16, %18 : vector<8x128xf32>
    %cst_14 = arith.constant dense<0.000000e+00> : vector<8xf32>
    %20 = vector.multi_reduction <add>, %19, %cst_14 [1] : vector<8x128xf32> to vector<8xf32>
    %21 = vector.shape_cast %20 : vector<8xf32> to vector<8x1xf32>
    %c0_15 = arith.constant 0 : index
    %c0_16 = arith.constant 0 : index
    %22 = memref.load %arg7[%c0_15, %c0_16] : memref<1x1xf32, #tpu.memory_space<smem>>
    %23 = vector.broadcast %22 : f32 to vector<8x1xf32>
    %24 = arith.addf %21, %23 : vector<8x1xf32>
    %25 = vector.shape_cast %24 : vector<8x1xf32> to vector<1x1x8xf32>
    %c0_17 = arith.constant 0 : index
    %c0_18 = arith.constant 0 : index
    %c0_19 = arith.constant 0 : index
    %26 = vector.load %arg8[%c0_17, %c0_18, %c0_19] : memref<1x1x8xf32, #tpu.memory_space<vmem>>, vector<1x1x8xf32>
    tpu.vector_store %arg8[%c0_17, %c0_18, %c0_19], %25 {strides = array<i32>} : memref<1x1x8xf32, #tpu.memory_space<vmem>>, vector<1x1x8xf32>,
    return
  }
  func.func @transform_0(%arg0: i32) -> (i32, i32) {
    %c0_i32 = arith.constant 0 : i32
    %c0_i32_0 = arith.constant 0 : i32
    return %arg0, %c0_i32 : i32, i32
  }
  func.func @transform_1(%arg0: i32) -> (i32, i32) {
    %c0_i32 = arith.constant 0 : i32
    %c0_i32_0 = arith.constant 0 : i32
    %c0_i32_1 = arith.constant 0 : i32
    return %c0_i32, %c0_i32_0 : i32, i32
  }
  func.func @transform_2(%arg0: i32) -> (i32, i32) {
    %c0_i32 = arith.constant 0 : i32
    %c0_i32_0 = arith.constant 0 : i32
    %c0_i32_1 = arith.constant 0 : i32
    return %c0_i32, %c0_i32_0 : i32, i32
  }
  func.func @transform_3(%arg0: i32) -> (i32, i32) {
    %c0_i32 = arith.constant 0 : i32
    %c0_i32_0 = arith.constant 0 : i32
    %c0_i32_1 = arith.constant 0 : i32
    return %c0_i32, %c0_i32_0 : i32, i32
  }
  func.func @transform_4(%arg0: i32) -> (i32, i32) {
    %c0_i32 = arith.constant 0 : i32
    %c0_i32_0 = arith.constant 0 : i32
    %c0_i32_1 = arith.constant 0 : i32
    return %c0_i32, %c0_i32_0 : i32, i32
  }
  func.func @transform_5(%arg0: i32) -> (i32, i32) {
    %c0_i32 = arith.constant 0 : i32
    %c0_i32_0 = arith.constant 0 : i32
    %c0_i32_1 = arith.constant 0 : i32
    return %c0_i32, %c0_i32_0 : i32, i32
  }
  func.func @transform_6(%arg0: i32) -> (i32, i32) {
    %c0_i32 = arith.constant 0 : i32
    %c0_i32_0 = arith.constant 0 : i32
    %c0_i32_1 = arith.constant 0 : i32
    return %c0_i32, %c0_i32_0 : i32, i32
  }
  func.func @transform_7(%arg0: i32) -> (i32, i32, i32) {
    %c0_i32 = arith.constant 0 : i32
    %c0_i32_0 = arith.constant 0 : i32
    %c0_i32_1 = arith.constant 0 : i32
    return %arg0, %c0_i32, %c0_i32_0 : i32, i32, i32
  }
}

module attributes {stable_mosaic.version = 11 : i64} {
  func.func @_hc_critic_kernel_column(%arg0: i32, %arg1: memref<8x32xf32, #tpu.memory_space<vmem>>, %arg2: memref<32x128xbf16, #tpu.memory_space<vmem>>, %arg3: memref<1x128xf32, #tpu.memory_space<vmem>>, %arg4: memref<128x128xbf16, #tpu.memory_space<vmem>>, %arg5: memref<1x128xf32, #tpu.memory_space<vmem>>, %arg6: memref<1x128xf32, #tpu.memory_space<vmem>>, %arg7: memref<1x1xf32, #tpu.memory_space<smem>>, %arg8: memref<8x1xf32, #tpu.memory_space<vmem>>) attributes {dimension_semantics = [#tpu.dimension_semantics<parallel>], iteration_bounds = array<i64: 1>, scalar_prefetch = 0 : i64, scratch_operands = 0 : i64, tpu.core_type = #tpu.core_type<tc>, window_params = [{transform_indices = @transform_0, window_bounds = array<i64: 8, 32>}, {pipeline_mode = #tpu.pipeline_mode<synchronous>, transform_indices = @transform_1, window_bounds = array<i64: 32, 128>}, {pipeline_mode = #tpu.pipeline_mode<synchronous>, transform_indices = @transform_2, window_bounds = array<i64: 1, 128>}, {pipeline_mode = #tpu.pipeline_mode<synchronous>, transform_indices = @transform_3, window_bounds = array<i64: 128, 128>}, {pipeline_mode = #tpu.pipeline_mode<synchronous>, transform_indices = @transform_4, window_bounds = array<i64: 1, 128>}, {pipeline_mode = #tpu.pipeline_mode<synchronous>, transform_indices = @transform_5, window_bounds = array<i64: 1, 128>}, {transform_indices = @transform_6, window_bounds = array<i64: 1, 1>}, {transform_indices = @transform_7, window_bounds = array<i64: 8, 1>}]} {
    %c0 = arith.constant 0 : index
    %c0_0 = arith.constant 0 : index
    %0 = vector.load %arg1[%c0, %c0_0] : memref<8x32xf32, #tpu.memory_space<vmem>>, vector<8x32xf32>
    %1 = arith.truncf %0 : vector<8x32xf32> to vector<8x32xbf16>
    %c0_1 = arith.constant 0 : index
    %c0_2 = arith.constant 0 : index
    %2 = vector.load %arg2[%c0_1, %c0_2] : memref<32x128xbf16, #tpu.memory_space<vmem>>, vector<32x128xbf16>
    %cst = arith.constant dense<0.000000e+00> : vector<8x128xf32>
    %3 = tpu.matmul %1, %2, %cst {dimension_numbers = #tpu.dot_dimension_numbers<[1], [0], [0], [1], [0, 0, 1, 1], [], []>} : vector<8x32xbf16>, vector<32x128xbf16>, vector<8x128xf32> -> vector<8x128xf32>
    %c0_3 = arith.constant 0 : index
    %c0_4 = arith.constant 0 : index
    %4 = vector.load %arg3[%c0_3, %c0_4] : memref<1x128xf32, #tpu.memory_space<vmem>>, vector<1x128xf32>
    %5 = vector.broadcast %4 : vector<1x128xf32> to vector<8x128xf32>
    %6 = arith.addf %3, %5 : vector<8x128xf32>
    %cst_5 = arith.constant 0.000000e+00 : f32
    %7 = vector.broadcast %cst_5 : f32 to vector<8x128xf32>
    %8 = arith.maximumf %6, %7 : vector<8x128xf32>
    %9 = arith.truncf %8 : vector<8x128xf32> to vector<8x128xbf16>
    %c0_6 = arith.constant 0 : index
    %c0_7 = arith.constant 0 : index
    %10 = vector.load %arg4[%c0_6, %c0_7] : memref<128x128xbf16, #tpu.memory_space<vmem>>, vector<128x128xbf16>
    %cst_8 = arith.constant dense<0.000000e+00> : vector<8x128xf32>
    %11 = tpu.matmul %9, %10, %cst_8 {dimension_numbers = #tpu.dot_dimension_numbers<[1], [0], [0], [1], [0, 0, 1, 1], [], []>} : vector<8x128xbf16>, vector<128x128xbf16>, vector<8x128xf32> -> vector<8x128xf32>
    %c0_9 = arith.constant 0 : index
    %c0_10 = arith.constant 0 : index
    %12 = vector.load %arg5[%c0_9, %c0_10] : memref<1x128xf32, #tpu.memory_space<vmem>>, vector<1x128xf32>
    %13 = vector.broadcast %12 : vector<1x128xf32> to vector<8x128xf32>
    %14 = arith.addf %11, %13 : vector<8x128xf32>
    %cst_11 = arith.constant 0.000000e+00 : f32
    %15 = vector.broadcast %cst_11 : f32 to vector<8x128xf32>
    %16 = arith.maximumf %14, %15 : vector<8x128xf32>
    %c0_12 = arith.constant 0 : index
    %c0_13 = arith.constant 0 : index
    %17 = vector.load %arg6[%c0_12, %c0_13] : memref<1x128xf32, #tpu.memory_space<vmem>>, vector<1x128xf32>
    %18 = vector.broadcast %17 : vector<1x128xf32> to vector<8x128xf32>
    %19 = arith.mulf %16, %18 : vector<8x128xf32>
    %cst_14 = arith.constant dense<0.000000e+00> : vector<8xf32>
    %20 = vector.multi_reduction <add>, %19, %cst_14 [1] : vector<8x128xf32> to vector<8xf32>
    %21 = vector.shape_cast %20 : vector<8xf32> to vector<8x1xf32>
    %c0_15 = arith.constant 0 : index
    %c0_16 = arith.constant 0 : index
    %22 = memref.load %arg7[%c0_15, %c0_16] : memref<1x1xf32, #tpu.memory_space<smem>>
    %23 = vector.broadcast %22 : f32 to vector<8x1xf32>
    %24 = arith.addf %21, %23 : vector<8x1xf32>
    %c0_17 = arith.constant 0 : index
    %c0_18 = arith.constant 0 : index
    %25 = vector.load %arg8[%c0_17, %c0_18] : memref<8x1xf32, #tpu.memory_space<vmem>>, vector<8x1xf32>
    tpu.vector_store %arg8[%c0_17, %c0_18], %24 {strides = array<i32>} : memref<8x1xf32, #tpu.memory_space<vmem>>, vector<8x1xf32>,
    return
  }
  func.func @transform_0(%arg0: i32) -> (i32, i32) {
    %c0_i32 = arith.constant 0 : i32
    %c0_i32_0 = arith.constant 0 : i32
    return %arg0, %c0_i32 : i32, i32
  }
  func.func @transform_1(%arg0: i32) -> (i32, i32) {
    %c0_i32 = arith.constant 0 : i32
    %c0_i32_0 = arith.constant 0 : i32
    %c0_i32_1 = arith.constant 0 : i32
    return %c0_i32, %c0_i32_0 : i32, i32
  }
  func.func @transform_2(%arg0: i32) -> (i32, i32) {
    %c0_i32 = arith.constant 0 : i32
    %c0_i32_0 = arith.constant 0 : i32
    %c0_i32_1 = arith.constant 0 : i32
    return %c0_i32, %c0_i32_0 : i32, i32
  }
  func.func @transform_3(%arg0: i32) -> (i32, i32) {
    %c0_i32 = arith.constant 0 : i32
    %c0_i32_0 = arith.constant 0 : i32
    %c0_i32_1 = arith.constant 0 : i32
    return %c0_i32, %c0_i32_0 : i32, i32
  }
  func.func @transform_4(%arg0: i32) -> (i32, i32) {
    %c0_i32 = arith.constant 0 : i32
    %c0_i32_0 = arith.constant 0 : i32
    %c0_i32_1 = arith.constant 0 : i32
    return %c0_i32, %c0_i32_0 : i32, i32
  }
  func.func @transform_5(%arg0: i32) -> (i32, i32) {
    %c0_i32 = arith.constant 0 : i32
    %c0_i32_0 = arith.constant 0 : i32
    %c0_i32_1 = arith.constant 0 : i32
    return %c0_i32, %c0_i32_0 : i32, i32
  }
  func.func @transform_6(%arg0: i32) -> (i32, i32) {
    %c0_i32 = arith.constant 0 : i32
    %c0_i32_0 = arith.constant 0 : i32
    %c0_i32_1 = arith.constant 0 : i32
    return %c0_i32, %c0_i32_0 : i32, i32
  }
  func.func @transform_7(%arg0: i32) -> (i32, i32) {
    %c0_i32 = arith.constant 0 : i32
    %c0_i32_0 = arith.constant 0 : i32
    return %arg0, %c0_i32 : i32, i32
  }
}

</mosaic_0001>

<llo_original>
// kernel: tpu_custom_call.1
$region0: #{tpu_custom_call.1}
  #allocation0 [shape = 'u32[]', space=smem, size = 0x4, offset = 0x4, fixed_abs, tag = 'smem constant byte address 0x4 - core index']
  #allocation1 [shape = 'u32[144,128]{1,0:T(1,128)}', space=vmem, size = 0x12000, scoped, tag = 'internal scratch']
  #allocation2 [shape = 'f32[1,1]{1,0:T(1,128)S(6)}', space=smem, size = 0x200, scoped, tag = 'scoped memory for tpu_custom_call.1']
  %s0 = inlined_call_operand.hbm [shape: f32[8,32], index: 0, kind: input, shape index: {}]
  %s1 = inlined_call_operand.hbm [shape: bf16[32,128], index: 1, kind: input, shape index: {}]
  %s2 = inlined_call_operand.vmem [shape: f32[1,128], index: 2, kind: input, shape index: {}]
  %s3 = inlined_call_operand.hbm [shape: bf16[128,128], index: 3, kind: input, shape index: {}]
  %s4 = inlined_call_operand.vmem [shape: f32[1,128], index: 4, kind: input, shape index: {}]
  %s5 = inlined_call_operand.vmem [shape: f32[1,128], index: 5, kind: input, shape index: {}]
  %s6 = inlined_call_operand.<no memory space> [shape: f32[1,1], index: 6, kind: input, shape index: {}]
  %s7 = inlined_call_operand.hbm [shape: f32[1,1,8], index: 7, kind: output, shape index: {}]
  %s8 = sld [smem:[#allocation0]]
  $region50: #{tpu_custom_call.1} parent=0
    _
  %s10 = ssub.s32 1, %s8
  %s11 = scalar_select 0, %s10, %s8
  %12 = sst [smem:[#allocation2]] %s6
  $region1: #{tpu_custom_call.1} parent=0
    #allocation3 [shape = 'u8[4096]{0}', space=vmem, size = 0x1000, scoped, tag = 'input window, operand 0, single buffered']
    #allocation4 [shape = 's32[1]{0}', space=sflag, size = 0x4, scoped, tag = 'scoped memory for tpu_custom_call.1']
    #allocation5 [shape = 's32[1]{0}', space=sflag, size = 0x4, scoped, tag = 'scoped memory for tpu_custom_call.1']
    #allocation6 [shape = 'u8[8192]{0}', space=vmem, size = 0x2000, scoped, tag = 'input window, operand 1, single buffered']
    #allocation7 [shape = 's32[1]{0}', space=sflag, size = 0x4, scoped, tag = 'scoped memory for tpu_custom_call.1']
    #allocation8 [shape = 'u8[32768]{0}', space=vmem, size = 0x8000, scoped, tag = 'input window, operand 3, single buffered']
    #allocation9 [shape = 'u8[512]{0}', space=vmem, size = 0x400, scoped, tag = 'output window, operand 0, single buffered']
    %13 = vsyncpa [#allocation4], 0
    %14 = vsyncpa [#allocation7], 0
    %15 = vsyncpa [#allocation5], 0
    // Predicated region
    $region2: #{tpu_custom_call.1} parent=1 // pred_check
      _
    $region3: #{tpu_custom_call.1} parent=1 // pred_check_branch
      %17 = sbr.rel (0) target = $region5
    $region4: #{tpu_custom_call.1} parent=1 // pred_region
      %s19 = ssub.s32 128, 128
      %20 = vsyncadd [#allocation4], %s19
      %s22 = sshll.u32 [#allocation3], 4
      %s23 = int_to_ptr.vmem [resolvable:$true] %s22
      %25 = dma.hbm_to_vmem [thread:$0]  %s0, 128, %s23, [#allocation4]
    $region5: #{tpu_custom_call.1} parent=1 // pred_fallthru
      _
    // Predicated region
    $region6: #{tpu_custom_call.1} parent=1 // pred_check
      _
    $region7: #{tpu_custom_call.1} parent=1 // pred_check_branch
      %27 = sbr.rel (0) target = $region9
    $region8: #{tpu_custom_call.1} parent=1 // pred_region
      %s29 = ssub.s32 256, 256
      %30 = vsyncadd [#allocation7], %s29
      %s31 = sshll.u32 [#allocation6], 4
      %s32 = int_to_ptr.vmem [resolvable:$true] %s31
      %37 = dma.hbm_to_vmem [thread:$0]  %s1, 256, %s32, [#allocation7], 64, 64, 4
    $region9: #{tpu_custom_call.1} parent=1 // pred_fallthru
      _
    // Predicated region
    $region10: #{tpu_custom_call.1} parent=1 // pred_check
      _
    $region11: #{tpu_custom_call.1} parent=1 // pred_check_branch
      %39 = sbr.rel (0) target = $region13
    $region12: #{tpu_custom_call.1} parent=1 // pred_region
      _
    $region13: #{tpu_custom_call.1} parent=1 // pred_fallthru
      _
    // Predicated region
    $region14: #{tpu_custom_call.1} parent=1 // pred_check
      _
    $region15: #{tpu_custom_call.1} parent=1 // pred_check_branch
      %41 = sbr.rel (0) target = $region17
    $region16: #{tpu_custom_call.1} parent=1 // pred_region
      %s43 = ssub.s32 1024, 1024
      %44 = vsyncadd [#allocation7], %s43
      %s45 = sshll.u32 [#allocation8], 4
      %s46 = int_to_ptr.vmem [resolvable:$true] %s45
      %51 = dma.hbm_to_vmem [thread:$0]  %s3, 1024, %s46, [#allocation7], 64, 64, 4
    $region17: #{tpu_custom_call.1} parent=1 // pred_fallthru
      _
    // Predicated region
    $region18: #{tpu_custom_call.1} parent=1 // pred_check
      _
    $region19: #{tpu_custom_call.1} parent=1 // pred_check_branch
      %53 = sbr.rel (0) target = $region21
    $region20: #{tpu_custom_call.1} parent=1 // pred_region
      _
    $region21: #{tpu_custom_call.1} parent=1 // pred_fallthru
      _
    // Predicated region
    $region22: #{tpu_custom_call.1} parent=1 // pred_check
      _
    $region23: #{tpu_custom_call.1} parent=1 // pred_check_branch
      %55 = sbr.rel (0) target = $region25
    $region24: #{tpu_custom_call.1} parent=1 // pred_region
      _
    $region25: #{tpu_custom_call.1} parent=1 // pred_fallthru
      _
    // Predicated region
    $region26: #{tpu_custom_call.1} parent=1 // pred_check
      _
    $region27: #{tpu_custom_call.1} parent=1 // pred_check_branch
      %57 = sbr.rel (0) target = $region29
    $region28: #{tpu_custom_call.1} parent=1 // pred_region
      _
    $region29: #{tpu_custom_call.1} parent=1 // pred_fallthru
      _
    // Predicated region
    $region30: #{tpu_custom_call.1} parent=1 // pred_check
      _
    $region31: #{tpu_custom_call.1} parent=1 // pred_check_branch
      %59 = sbr.rel (0) target = $region33
    $region32: #{tpu_custom_call.1} parent=1 // pred_region
      %60 = dma.done [#allocation4], 128
    $region33: #{tpu_custom_call.1} parent=1 // pred_fallthru
      _
    // Predicated region
    $region34: #{tpu_custom_call.1} parent=1 // pred_check
      _
    $region35: #{tpu_custom_call.1} parent=1 // pred_check_branch
      %62 = sbr.rel (0) target = $region37
    $region36: #{tpu_custom_call.1} parent=1 // pred_region
      %63 = dma.done [#allocation7], 256
    $region37: #{tpu_custom_call.1} parent=1 // pred_fallthru
      _
    // Predicated region
    $region38: #{tpu_custom_call.1} parent=1 // pred_check
      _
    $region39: #{tpu_custom_call.1} parent=1 // pred_check_branch
      %65 = sbr.rel (0) target = $region41
    $region40: #{tpu_custom_call.1} parent=1 // pred_region
      %66 = dma.done [#allocation7], 1024
    $region41: #{tpu_custom_call.1} parent=1 // pred_fallthru
      _
    %v68 = vld [vmem:[#allocation3] sm:$0xff]
    %v69 = vpack.c.bf16 %v68, %v68
    %v70 = vld [vmem:[#allocation6] sm:$0xf]
    %v71 = vld [vmem:[#allocation6 + $0x4] sm:$0xf]
    %v72 = vld [vmem:[#allocation6 + $0x8] sm:$0xf]
    %v73 = vld [vmem:[#allocation6 + $0xc] sm:$0xf]
    %v74 = vld [vmem:[%s2] sm:$0x1]
    %v76 = vlaneseq
    %v77 = vshrl.u32 %v76, 7
    %v78 = vsub.s32 0, %v77
    %v79 = vrot.slane %v74, %v78
    %v85 = vunpack.c.l.b16 %v70
    %v86 = vunpack.c.l.b16 %v71
    %v87 = vunpack.c.l.b16 %v72
    %v88 = vunpack.c.l.b16 %v73
    %v89 = vpack.c.b16 %v86, %v85
    %v90 = vpack.c.b16 %v88, %v87
    %vm93 = vcmask 261120
    %v95 = vsel %vm93, %v69, 0
    %97 = vmatprep.subr.bf16.mxu0 0
    %98 = vmatpush1.bf16.msra.mxu0 0
    %99 = vmatprep.subr.bf16.mxu0 0
    %100 = vmatpush1.bf16.msra.mxu0 0
    %101 = vmatprep.subr.bf16.mxu0 0
    %102 = vmatpush1.bf16.msra.mxu0 0
    %103 = vmatprep.subr.bf16.mxu0 0
    %104 = vmatpush1.bf16.msra.mxu0 0
    %105 = vmatprep.subr.bf16.mxu0 0
    %106 = vmatpush1.bf16.msra.mxu0 0
    %107 = vmatprep.subr.bf16.mxu0 0
    %108 = vmatpush1.bf16.msra.mxu0 0
    %109 = vmatprep.subr.bf16.mxu0 0
    %110 = vmatpush1.bf16.msra.mxu0 %v90
    %111 = vmatprep.subr.bf16.mxu0 0
    %112 = vmatpush1.bf16.msra.mxu0 %v89
    %113 = vmatprep.subr.bf16.mxu0 0
    %114 = vmatpush2.bf16.msra.mxu0 0
    %115 = vmatprep.subr.bf16.mxu0 0
    %116 = vmatpush2.bf16.msra.mxu0 0
    %117 = vmatprep.subr.bf16.mxu0 0
    %118 = vmatpush2.bf16.msra.mxu0 0
    %119 = vmatprep.subr.bf16.mxu0 0
    %120 = vmatpush2.bf16.msra.mxu0 0
    %121 = vmatprep.subr.bf16.mxu0 0
    %122 = vmatpush2.bf16.msra.mxu0 0
    %123 = vmatprep.subr.bf16.mxu0 0
    %124 = vmatpush2.bf16.msra.mxu0 0
    %125 = vmatprep.subr.bf16.mxu0 0
    %126 = vmatpush2.bf16.msra.mxu0 0
    %127 = vmatprep.subr.bf16.mxu0 0
    %128 = vmatpush2.bf16.msra.mxu0 0
    %129 = vmatprep.mubr.bf16.mxu0 0
    %130 = vmatmul.mubr.bf16.gmra.mxu0 %v95
    %v131 = vpop.f32.mrf.mxu0
    %v132 = vadd.f32 %v79, %v131
    %v133 = vpop.f32.mrf.mxu0
    %v134 = vpop.f32.mrf.mxu0
    %v135 = vpop.f32.mrf.mxu0
    %136 = vdwg.mxu0
    %v137 = vmax.f32 %v132, 0.0
    %v138 = vpack.c.bf16 %v137, %v137
    %v139 = vld [vmem:[#allocation8] sm:$0xf]
    %v140 = vld [vmem:[#allocation8 + $0x4] sm:$0xf]
    %v141 = vld [vmem:[#allocation8 + $0x8] sm:$0xf]
    %v142 = vld [vmem:[#allocation8 + $0xc] sm:$0xf]
    %v143 = vld [vmem:[#allocation8 + $0x10] sm:$0xf]
    %v144 = vld [vmem:[#allocation8 + $0x14] sm:$0xf]
    %v145 = vld [vmem:[#allocation8 + $0x18] sm:$0xf]
    %v146 = vld [vmem:[#allocation8 + $0x1c] sm:$0xf]
    %v147 = vld [vmem:[#allocation8 + $0x20] sm:$0xf]
    %v148 = vld [vmem:[#allocation8 + $0x24] sm:$0xf]
    %v149 = vld [vmem:[#allocation8 + $0x28] sm:$0xf]
    %v150 = vld [vmem:[#allocation8 + $0x2c] sm:$0xf]
    %v151 = vld [vmem:[#allocation8 + $0x30] sm:$0xf]
    %v152 = vld [vmem:[#allocation8 + $0x34] sm:$0xf]
    %v153 = vld [vmem:[#allocation8 + $0x38] sm:$0xf]
    %v154 = vld [vmem:[#allocation8 + $0x3c] sm:$0xf]
    %v155 = vld [vmem:[%s4] sm:$0x1]
    %v157 = vlaneseq
    %v158 = vshrl.u32 %v157, 7
    %v159 = vsub.s32 0, %v158
    %v160 = vrot.slane %v155, %v159
    %v178 = vunpack.c.l.b16 %v139
    %v179 = vunpack.c.l.b16 %v140
    %v180 = vunpack.c.l.b16 %v141
    %v181 = vunpack.c.l.b16 %v142
    %v182 = vunpack.c.l.b16 %v143
    %v183 = vunpack.c.l.b16 %v144
    %v184 = vunpack.c.l.b16 %v145
    %v185 = vunpack.c.l.b16 %v146
    %v186 = vunpack.c.l.b16 %v147
    %v187 = vunpack.c.l.b16 %v148
    %v188 = vunpack.c.l.b16 %v149
    %v189 = vunpack.c.l.b16 %v150
    %v190 = vunpack.c.l.b16 %v151
    %v191 = vunpack.c.l.b16 %v152
    %v192 = vunpack.c.l.b16 %v153
    %v193 = vunpack.c.l.b16 %v154
    %v194 = vpack.c.b16 %v179, %v178
    %v195 = vpack.c.b16 %v181, %v180
    %v196 = vpack.c.b16 %v183, %v182
    %v197 = vpack.c.b16 %v185, %v184
    %v198 = vpack.c.b16 %v187, %v186
    %v199 = vpack.c.b16 %v189, %v188
    %v200 = vpack.c.b16 %v191, %v190
    %v201 = vpack.c.b16 %v193, %v192
    %210 = vmatprep.subr.bf16.mxu0 0
    %211 = vmatpush1.bf16.msra.mxu0 %v201
    %212 = vmatprep.subr.bf16.mxu0 0
    %213 = vmatpush1.bf16.msra.mxu0 %v200
    %214 = vmatprep.subr.bf16.mxu0 0
    %215 = vmatpush1.bf16.msra.mxu0 %v199
    %216 = vmatprep.subr.bf16.mxu0 0
    %217 = vmatpush1.bf16.msra.mxu0 %v198
    %218 = vmatprep.subr.bf16.mxu0 0
    %219 = vmatpush1.bf16.msra.mxu0 %v197
    %220 = vmatprep.subr.bf16.mxu0 0
    %221 = vmatpush1.bf16.msra.mxu0 %v196
    %222 = vmatprep.subr.bf16.mxu0 0
    %223 = vmatpush1.bf16.msra.mxu0 %v195
    %224 = vmatprep.subr.bf16.mxu0 0
    %225 = vmatpush1.bf16.msra.mxu0 %v194
    %226 = vmatprep.subr.bf16.mxu0 0
    %227 = vmatpush2.bf16.msra.mxu0 0
    %228 = vmatprep.subr.bf16.mxu0 0
    %229 = vmatpush2.bf16.msra.mxu0 0
    %230 = vmatprep.subr.bf16.mxu0 0
    %231 = vmatpush2.bf16.msra.mxu0 0
    %232 = vmatprep.subr.bf16.mxu0 0
    %233 = vmatpush2.bf16.msra.mxu0 0
    %234 = vmatprep.subr.bf16.mxu0 0
    %235 = vmatpush2.bf16.msra.mxu0 0
    %236 = vmatprep.subr.bf16.mxu0 0
    %237 = vmatpush2.bf16.msra.mxu0 0
    %238 = vmatprep.subr.bf16.mxu0 0
    %239 = vmatpush2.bf16.msra.mxu0 0
    %240 = vmatprep.subr.bf16.mxu0 0
    %241 = vmatpush2.bf16.msra.mxu0 0
    %242 = vmatprep.mubr.bf16.mxu0 0
    %243 = vmatmul.mubr.bf16.gmra.mxu0 %v138
    %v244 = vpop.f32.mrf.mxu0
    %v245 = vadd.f32 %v160, %v244
    %v246 = vpop.f32.mrf.mxu0
    %v247 = vpop.f32.mrf.mxu0
    %v248 = vpop.f32.mrf.mxu0
    %249 = vdwg.mxu0
    %v250 = vmax.f32 %v245, 0.0
    %v251 = vld [vmem:[%s5] sm:$0x1]
    %v253 = vlaneseq
    %v254 = vshrl.u32 %v253, 7
    %v255 = vsub.s32 0, %v254
    %v256 = vrot.slane %v251, %v255
    %v258 = vmul.f32 %v250, %v256
    %259 = vadd.xlane.f32.xlu0 %v258
    %v260 = vpop.xlane.xlu0 %259
    %s261 = sld [smem:[#allocation2]]
    %v262 = vstv %s261
    %v263 = vadd.f32 %v260, %v262
    %v265 = vlaneseq
    %v266 = vand.u32 %v265, 127
    %v267 = vlaneseq
    %v268 = vshrl.u32 %v267, 7
    %v269 = vsub.s32 %v266, %v268
    %v270 = vrot.slane %v263, %v269
    %vm272 = vcmask 57344
    %273 = vst.msk [vmem:[#allocation9] sm:$0x1] %vm272, %v270
    // Predicated region
    $region42: #{tpu_custom_call.1} parent=1 // pred_check
      _
    $region43: #{tpu_custom_call.1} parent=1 // pred_check_branch
      %275 = sbr.rel (0) target = $region45
    $region44: #{tpu_custom_call.1} parent=1 // pred_region
      %s277 = ssub.s32 16, 16
      %278 = vsyncadd [#allocation5], %s277
      %s280 = sshll.u32 [#allocation9], 4
      %s281 = int_to_ptr.vmem [resolvable:$true] %s280
      %283 = dma.vmem_to_hbm [thread:$0]  %s281, 16, %s7, [#allocation5]
    $region45: #{tpu_custom_call.1} parent=1 // pred_fallthru
      _
    // Predicated region
    $region46: #{tpu_custom_call.1} parent=1 // pred_check
      _
    $region47: #{tpu_custom_call.1} parent=1 // pred_check_branch
      %285 = sbr.rel (0) target = $region49
    $region48: #{tpu_custom_call.1} parent=1 // pred_region
      %286 = dma.done [#allocation5], 16
    $region49: #{tpu_custom_call.1} parent=1 // pred_fallthru
      _
    %287 = vsyncpa [#allocation4], 1
    %288 = vsyncpa [#allocation7], 1
    %289 = vsyncpa [#allocation5], 1

// kernel: tpu_custom_call.1
$region0: #{tpu_custom_call.1}
  #allocation0 [shape = 'u32[]', space=smem, size = 0x4, offset = 0x4, fixed_abs, tag = 'smem constant byte address 0x4 - core index']
  #allocation1 [shape = 'u32[144,128]{1,0:T(1,128)}', space=vmem, size = 0x12000, scoped, tag = 'internal scratch']
  #allocation2 [shape = 'f32[1,1]{1,0:T(1,128)S(6)}', space=smem, size = 0x200, scoped, tag = 'scoped memory for tpu_custom_call.1']
  %s0 = inlined_call_operand.hbm [shape: f32[8,32], index: 0, kind: input, shape index: {}]
  %s1 = inlined_call_operand.hbm [shape: bf16[32,128], index: 1, kind: input, shape index: {}]
  %s2 = inlined_call_operand.vmem [shape: f32[1,128], index: 2, kind: input, shape index: {}]
  %s3 = inlined_call_operand.hbm [shape: bf16[128,128], index: 3, kind: input, shape index: {}]
  %s4 = inlined_call_operand.vmem [shape: f32[1,128], index: 4, kind: input, shape index: {}]
  %s5 = inlined_call_operand.vmem [shape: f32[1,128], index: 5, kind: input, shape index: {}]
  %s6 = inlined_call_operand.<no memory space> [shape: f32[1,1], index: 6, kind: input, shape index: {}]
  %s7 = inlined_call_operand.vmem [shape: f32[8,1], index: 7, kind: output, shape index: {}]
  %s8 = sld [smem:[#allocation0]]
  $region50: #{tpu_custom_call.1} parent=0
    _
  %s10 = ssub.s32 1, %s8
  %s11 = scalar_select 0, %s10, %s8
  %12 = sst [smem:[#allocation2]] %s6
  $region1: #{tpu_custom_call.1} parent=0
    #allocation3 [shape = 'u8[4096]{0}', space=vmem, size = 0x1000, scoped, tag = 'input window, operand 0, single buffered']
    #allocation4 [shape = 's32[1]{0}', space=sflag, size = 0x4, scoped, tag = 'scoped memory for tpu_custom_call.1']
    #allocation5 [shape = 'u8[8192]{0}', space=vmem, size = 0x2000, scoped, tag = 'input window, operand 1, single buffered']
    #allocation6 [shape = 's32[1]{0}', space=sflag, size = 0x4, scoped, tag = 'scoped memory for tpu_custom_call.1']
    #allocation7 [shape = 'u8[32768]{0}', space=vmem, size = 0x8000, scoped, tag = 'input window, operand 3, single buffered']
    %13 = vsyncpa [#allocation4], 0
    %14 = vsyncpa [#allocation6], 0
    // Predicated region
    $region2: #{tpu_custom_call.1} parent=1 // pred_check
      _
    $region3: #{tpu_custom_call.1} parent=1 // pred_check_branch
      %16 = sbr.rel (0) target = $region5
    $region4: #{tpu_custom_call.1} parent=1 // pred_region
      %s18 = ssub.s32 128, 128
      %19 = vsyncadd [#allocation4], %s18
      %s21 = sshll.u32 [#allocation3], 4
      %s22 = int_to_ptr.vmem [resolvable:$true] %s21
      %24 = dma.hbm_to_vmem [thread:$0]  %s0, 128, %s22, [#allocation4]
    $region5: #{tpu_custom_call.1} parent=1 // pred_fallthru
      _
    // Predicated region
    $region6: #{tpu_custom_call.1} parent=1 // pred_check
      _
    $region7: #{tpu_custom_call.1} parent=1 // pred_check_branch
      %26 = sbr.rel (0) target = $region9
    $region8: #{tpu_custom_call.1} parent=1 // pred_region
      %s28 = ssub.s32 256, 256
      %29 = vsyncadd [#allocation6], %s28
      %s30 = sshll.u32 [#allocation5], 4
      %s31 = int_to_ptr.vmem [resolvable:$true] %s30
      %36 = dma.hbm_to_vmem [thread:$0]  %s1, 256, %s31, [#allocation6], 64, 64, 4
    $region9: #{tpu_custom_call.1} parent=1 // pred_fallthru
      _
    // Predicated region
    $region10: #{tpu_custom_call.1} parent=1 // pred_check
      _
    $region11: #{tpu_custom_call.1} parent=1 // pred_check_branch
      %38 = sbr.rel (0) target = $region13
    $region12: #{tpu_custom_call.1} parent=1 // pred_region
      _
    $region13: #{tpu_custom_call.1} parent=1 // pred_fallthru
      _
    // Predicated region
    $region14: #{tpu_custom_call.1} parent=1 // pred_check
      _
    $region15: #{tpu_custom_call.1} parent=1 // pred_check_branch
      %40 = sbr.rel (0) target = $region17
    $region16: #{tpu_custom_call.1} parent=1 // pred_region
      %s42 = ssub.s32 1024, 1024
      %43 = vsyncadd [#allocation6], %s42
      %s44 = sshll.u32 [#allocation7], 4
      %s45 = int_to_ptr.vmem [resolvable:$true] %s44
      %50 = dma.hbm_to_vmem [thread:$0]  %s3, 1024, %s45, [#allocation6], 64, 64, 4
    $region17: #{tpu_custom_call.1} parent=1 // pred_fallthru
      _
    // Predicated region
    $region18: #{tpu_custom_call.1} parent=1 // pred_check
      _
    $region19: #{tpu_custom_call.1} parent=1 // pred_check_branch
      %52 = sbr.rel (0) target = $region21
    $region20: #{tpu_custom_call.1} parent=1 // pred_region
      _
    $region21: #{tpu_custom_call.1} parent=1 // pred_fallthru
      _
    // Predicated region
    $region22: #{tpu_custom_call.1} parent=1 // pred_check
      _
    $region23: #{tpu_custom_call.1} parent=1 // pred_check_branch
      %54 = sbr.rel (0) target = $region25
    $region24: #{tpu_custom_call.1} parent=1 // pred_region
      _
    $region25: #{tpu_custom_call.1} parent=1 // pred_fallthru
      _
    // Predicated region
    $region26: #{tpu_custom_call.1} parent=1 // pred_check
      _
    $region27: #{tpu_custom_call.1} parent=1 // pred_check_branch
      %56 = sbr.rel (0) target = $region29
    $region28: #{tpu_custom_call.1} parent=1 // pred_region
      _
    $region29: #{tpu_custom_call.1} parent=1 // pred_fallthru
      _
    // Predicated region
    $region30: #{tpu_custom_call.1} parent=1 // pred_check
      _
    $region31: #{tpu_custom_call.1} parent=1 // pred_check_branch
      %58 = sbr.rel (0) target = $region33
    $region32: #{tpu_custom_call.1} parent=1 // pred_region
      %59 = dma.done [#allocation4], 128
    $region33: #{tpu_custom_call.1} parent=1 // pred_fallthru
      _
    // Predicated region
    $region34: #{tpu_custom_call.1} parent=1 // pred_check
      _
    $region35: #{tpu_custom_call.1} parent=1 // pred_check_branch
      %61 = sbr.rel (0) target = $region37
    $region36: #{tpu_custom_call.1} parent=1 // pred_region
      %62 = dma.done [#allocation6], 256
    $region37: #{tpu_custom_call.1} parent=1 // pred_fallthru
      _
    // Predicated region
    $region38: #{tpu_custom_call.1} parent=1 // pred_check
      _
    $region39: #{tpu_custom_call.1} parent=1 // pred_check_branch
      %64 = sbr.rel (0) target = $region41
    $region40: #{tpu_custom_call.1} parent=1 // pred_region
      %65 = dma.done [#allocation6], 1024
    $region41: #{tpu_custom_call.1} parent=1 // pred_fallthru
      _
    %v67 = vld [vmem:[#allocation3] sm:$0xff]
    %v68 = vpack.c.bf16 %v67, %v67
    %v69 = vld [vmem:[#allocation5] sm:$0xf]
    %v70 = vld [vmem:[#allocation5 + $0x4] sm:$0xf]
    %v71 = vld [vmem:[#allocation5 + $0x8] sm:$0xf]
    %v72 = vld [vmem:[#allocation5 + $0xc] sm:$0xf]
    %v73 = vld [vmem:[%s2] sm:$0x1]
    %v75 = vlaneseq
    %v76 = vshrl.u32 %v75, 7
    %v77 = vsub.s32 0, %v76
    %v78 = vrot.slane %v73, %v77
    %v84 = vunpack.c.l.b16 %v69
    %v85 = vunpack.c.l.b16 %v70
    %v86 = vunpack.c.l.b16 %v71
    %v87 = vunpack.c.l.b16 %v72
    %v88 = vpack.c.b16 %v85, %v84
    %v89 = vpack.c.b16 %v87, %v86
    %vm92 = vcmask 261120
    %v94 = vsel %vm92, %v68, 0
    %96 = vmatprep.subr.bf16.mxu0 0
    %97 = vmatpush1.bf16.msra.mxu0 0
    %98 = vmatprep.subr.bf16.mxu0 0
    %99 = vmatpush1.bf16.msra.mxu0 0
    %100 = vmatprep.subr.bf16.mxu0 0
    %101 = vmatpush1.bf16.msra.mxu0 0
    %102 = vmatprep.subr.bf16.mxu0 0
    %103 = vmatpush1.bf16.msra.mxu0 0
    %104 = vmatprep.subr.bf16.mxu0 0
    %105 = vmatpush1.bf16.msra.mxu0 0
    %106 = vmatprep.subr.bf16.mxu0 0
    %107 = vmatpush1.bf16.msra.mxu0 0
    %108 = vmatprep.subr.bf16.mxu0 0
    %109 = vmatpush1.bf16.msra.mxu0 %v89
    %110 = vmatprep.subr.bf16.mxu0 0
    %111 = vmatpush1.bf16.msra.mxu0 %v88
    %112 = vmatprep.subr.bf16.mxu0 0
    %113 = vmatpush2.bf16.msra.mxu0 0
    %114 = vmatprep.subr.bf16.mxu0 0
    %115 = vmatpush2.bf16.msra.mxu0 0
    %116 = vmatprep.subr.bf16.mxu0 0
    %117 = vmatpush2.bf16.msra.mxu0 0
    %118 = vmatprep.subr.bf16.mxu0 0
    %119 = vmatpush2.bf16.msra.mxu0 0
    %120 = vmatprep.subr.bf16.mxu0 0
    %121 = vmatpush2.bf16.msra.mxu0 0
    %122 = vmatprep.subr.bf16.mxu0 0
    %123 = vmatpush2.bf16.msra.mxu0 0
    %124 = vmatprep.subr.bf16.mxu0 0
    %125 = vmatpush2.bf16.msra.mxu0 0
    %126 = vmatprep.subr.bf16.mxu0 0
    %127 = vmatpush2.bf16.msra.mxu0 0
    %128 = vmatprep.mubr.bf16.mxu0 0
    %129 = vmatmul.mubr.bf16.gmra.mxu0 %v94
    %v130 = vpop.f32.mrf.mxu0
    %v131 = vadd.f32 %v78, %v130
    %v132 = vpop.f32.mrf.mxu0
    %v133 = vpop.f32.mrf.mxu0
    %v134 = vpop.f32.mrf.mxu0
    %135 = vdwg.mxu0
    %v136 = vmax.f32 %v131, 0.0
    %v137 = vpack.c.bf16 %v136, %v136
    %v138 = vld [vmem:[#allocation7] sm:$0xf]
    %v139 = vld [vmem:[#allocation7 + $0x4] sm:$0xf]
    %v140 = vld [vmem:[#allocation7 + $0x8] sm:$0xf]
    %v141 = vld [vmem:[#allocation7 + $0xc] sm:$0xf]
    %v142 = vld [vmem:[#allocation7 + $0x10] sm:$0xf]
    %v143 = vld [vmem:[#allocation7 + $0x14] sm:$0xf]
    %v144 = vld [vmem:[#allocation7 + $0x18] sm:$0xf]
    %v145 = vld [vmem:[#allocation7 + $0x1c] sm:$0xf]
    %v146 = vld [vmem:[#allocation7 + $0x20] sm:$0xf]
    %v147 = vld [vmem:[#allocation7 + $0x24] sm:$0xf]
    %v148 = vld [vmem:[#allocation7 + $0x28] sm:$0xf]
    %v149 = vld [vmem:[#allocation7 + $0x2c] sm:$0xf]
    %v150 = vld [vmem:[#allocation7 + $0x30] sm:$0xf]
    %v151 = vld [vmem:[#allocation7 + $0x34] sm:$0xf]
    %v152 = vld [vmem:[#allocation7 + $0x38] sm:$0xf]
    %v153 = vld [vmem:[#allocation7 + $0x3c] sm:$0xf]
    %v154 = vld [vmem:[%s4] sm:$0x1]
    %v156 = vlaneseq
    %v157 = vshrl.u32 %v156, 7
    %v158 = vsub.s32 0, %v157
    %v159 = vrot.slane %v154, %v158
    %v177 = vunpack.c.l.b16 %v138
    %v178 = vunpack.c.l.b16 %v139
    %v179 = vunpack.c.l.b16 %v140
    %v180 = vunpack.c.l.b16 %v141
    %v181 = vunpack.c.l.b16 %v142
    %v182 = vunpack.c.l.b16 %v143
    %v183 = vunpack.c.l.b16 %v144
    %v184 = vunpack.c.l.b16 %v145
    %v185 = vunpack.c.l.b16 %v146
    %v186 = vunpack.c.l.b16 %v147
    %v187 = vunpack.c.l.b16 %v148
    %v188 = vunpack.c.l.b16 %v149
    %v189 = vunpack.c.l.b16 %v150
    %v190 = vunpack.c.l.b16 %v151
    %v191 = vunpack.c.l.b16 %v152
    %v192 = vunpack.c.l.b16 %v153
    %v193 = vpack.c.b16 %v178, %v177
    %v194 = vpack.c.b16 %v180, %v179
    %v195 = vpack.c.b16 %v182, %v181
    %v196 = vpack.c.b16 %v184, %v183
    %v197 = vpack.c.b16 %v186, %v185
    %v198 = vpack.c.b16 %v188, %v187
    %v199 = vpack.c.b16 %v190, %v189
    %v200 = vpack.c.b16 %v192, %v191
    %209 = vmatprep.subr.bf16.mxu0 0
    %210 = vmatpush1.bf16.msra.mxu0 %v200
    %211 = vmatprep.subr.bf16.mxu0 0
    %212 = vmatpush1.bf16.msra.mxu0 %v199
    %213 = vmatprep.subr.bf16.mxu0 0
    %214 = vmatpush1.bf16.msra.mxu0 %v198
    %215 = vmatprep.subr.bf16.mxu0 0
    %216 = vmatpush1.bf16.msra.mxu0 %v197
    %217 = vmatprep.subr.bf16.mxu0 0
    %218 = vmatpush1.bf16.msra.mxu0 %v196
    %219 = vmatprep.subr.bf16.mxu0 0
    %220 = vmatpush1.bf16.msra.mxu0 %v195
    %221 = vmatprep.subr.bf16.mxu0 0
    %222 = vmatpush1.bf16.msra.mxu0 %v194
    %223 = vmatprep.subr.bf16.mxu0 0
    %224 = vmatpush1.bf16.msra.mxu0 %v193
    %225 = vmatprep.subr.bf16.mxu0 0
    %226 = vmatpush2.bf16.msra.mxu0 0
    %227 = vmatprep.subr.bf16.mxu0 0
    %228 = vmatpush2.bf16.msra.mxu0 0
    %229 = vmatprep.subr.bf16.mxu0 0
    %230 = vmatpush2.bf16.msra.mxu0 0
    %231 = vmatprep.subr.bf16.mxu0 0
    %232 = vmatpush2.bf16.msra.mxu0 0
    %233 = vmatprep.subr.bf16.mxu0 0
    %234 = vmatpush2.bf16.msra.mxu0 0
    %235 = vmatprep.subr.bf16.mxu0 0
    %236 = vmatpush2.bf16.msra.mxu0 0
    %237 = vmatprep.subr.bf16.mxu0 0
    %238 = vmatpush2.bf16.msra.mxu0 0
    %239 = vmatprep.subr.bf16.mxu0 0
    %240 = vmatpush2.bf16.msra.mxu0 0
    %241 = vmatprep.mubr.bf16.mxu0 0
    %242 = vmatmul.mubr.bf16.gmra.mxu0 %v137
    %v243 = vpop.f32.mrf.mxu0
    %v244 = vadd.f32 %v159, %v243
    %v245 = vpop.f32.mrf.mxu0
    %v246 = vpop.f32.mrf.mxu0
    %v247 = vpop.f32.mrf.mxu0
    %248 = vdwg.mxu0
    %v249 = vmax.f32 %v244, 0.0
    %v250 = vld [vmem:[%s5] sm:$0x1]
    %v252 = vlaneseq
    %v253 = vshrl.u32 %v252, 7
    %v254 = vsub.s32 0, %v253
    %v255 = vrot.slane %v250, %v254
    %v257 = vmul.f32 %v249, %v255
    %258 = vadd.xlane.f32.xlu0 %v257
    %v259 = vpop.xlane.xlu0 %258
    %s260 = sld [smem:[#allocation2]]
    %v261 = vstv %s260
    %v262 = vadd.f32 %v259, %v261
    %vm263 = vcmask 7168
    %264 = vst.msk [vmem:[%s7] sm:$0xff] %vm263, %v262
    // Predicated region
    $region42: #{tpu_custom_call.1} parent=1 // pred_check
      _
    $region43: #{tpu_custom_call.1} parent=1 // pred_check_branch
      %266 = sbr.rel (0) target = $region45
    $region44: #{tpu_custom_call.1} parent=1 // pred_region
      _
    $region45: #{tpu_custom_call.1} parent=1 // pred_fallthru
      _
    // Predicated region
    $region46: #{tpu_custom_call.1} parent=1 // pred_check
      _
    $region47: #{tpu_custom_call.1} parent=1 // pred_check_branch
      %268 = sbr.rel (0) target = $region49
    $region48: #{tpu_custom_call.1} parent=1 // pred_region
      _
    $region49: #{tpu_custom_call.1} parent=1 // pred_fallthru
      _
    %269 = vsyncpa [#allocation4], 1
    %270 = vsyncpa [#allocation6], 1

</llo_original>
